<compile_context>
chip_gen: v7x
topology: tpu7x:2x2x1
jax: 0.10.0
libtpu: 0.0.40
codegen_flags: <defaults>
</compile_context>

<pallas_src>
import jax
import jax.numpy as jnp
from jax.experimental import pallas as pl
from jax.experimental.pallas import tpu as pltpu

_LANES = 512      # lane-dense tile width (multiple of 128)
_MAX_ROWS = 1024  # max rows per tile: 1024*512*4B = 2 MiB per buffer


def _lineal_kernel(scale_ref, z_ref, o_ref):
    # scale_ref: (1,1) SMEM scalar holding dt * alpha
    # z_ref, o_ref: (TR, L) VMEM tiles
    o_ref[...] = z_ref[...] - scale_ref[0, 0]


def lineal_forward(z, dt, alpha):
    """y_hat = z - dt * alpha, matching the PyTorch module's forward.

    z:     float array, any shape (module is shape-agnostic; here NCHW).
    dt:    python float / 0-d scalar.
    alpha: float32 array of shape (1,)  (the nn.Parameter).
    """
    orig_shape = z.shape
    zf = z.reshape(-1).astype(jnp.float32)
    total = zf.shape[0]

    # Lane-dense repack: (rows, _LANES) with rows padded to a multiple of the
    # row-tile so the block shape is (8,128)-aligned.
    L = _LANES
    rows = -(-total // L)                       # cdiv
    if rows < _MAX_ROWS:
        tr = max(8, ((rows + 7) // 8) * 8)      # small input: one 8-row-aligned tile
    else:
        tr = _MAX_ROWS
    padded_rows = -(-rows // tr) * tr
    padded_total = padded_rows * L
    if padded_total != total:
        zf = jnp.pad(zf, (0, padded_total - total))
    z2d = zf.reshape(padded_rows, L)
    grid = (padded_rows // tr,)

    # Fold dt * alpha into one scalar, passed via SMEM.
    scale_smem = (jnp.asarray(dt, jnp.float32)
                  * jnp.asarray(alpha, jnp.float32).reshape(())).reshape(1, 1)

    out2d = pl.pallas_call(
        _lineal_kernel,
        out_shape=jax.ShapeDtypeStruct((padded_rows, L), jnp.float32),
        grid_spec=pltpu.PrefetchScalarGridSpec(
            num_scalar_prefetch=0,
            grid=grid,
            in_specs=[
                pl.BlockSpec(memory_space=pltpu.SMEM),        # dt*alpha scalar
                pl.BlockSpec((tr, L), lambda i: (i, 0)),      # z tile
            ],
            out_specs=pl.BlockSpec((tr, L), lambda i: (i, 0)),
        ),
        compiler_params=pltpu.CompilerParams(
            dimension_semantics=("parallel",),  # independent tiles -> both TCs on v7x
        ),
    )(scale_smem, z2d)

    return out2d.reshape(-1)[:total].reshape(orig_shape)


if __name__ == "__main__":
    key = jax.random.PRNGKey(0)

    # Deterministic parameter init, matching lineal.__init__ default (init_phys=None)
    alpha = jnp.array([0.5], dtype=jnp.float32)
    dt = 0.1

    # Primary small NCHW input consistent with a physics-state tensor
    B, C, H, W = 2, 4, 16, 16
    z = jax.random.normal(key, (B, C, H, W), dtype=jnp.float32)

    y_hat = lineal_forward(z, dt, alpha)
    jax.block_until_ready(y_hat)
    ref = z - jnp.float32(dt) * alpha[0]
    assert y_hat.shape == z.shape
    assert jnp.allclose(y_hat, ref, atol=1e-6), "mismatch vs reference (primary)"

    # Secondary check: larger tensor exercising the multi-tile pipelined path
    k1, k2 = jax.random.split(key)
    z_big = jax.random.normal(k1, (8, 8, 128, 128), dtype=jnp.float32)
    y_big = lineal_forward(z_big, dt, alpha)
    jax.block_until_ready(y_big)
    assert jnp.allclose(y_big, z_big - jnp.float32(dt) * alpha[0], atol=1e-6), \
        "mismatch vs reference (tiled)"

    # Tertiary check: ragged shape exercising the pad/unpad path
    z_odd = jax.random.normal(k2, (2, 3, 17, 19), dtype=jnp.float32)
    y_odd = lineal_forward(z_odd, dt, alpha)
    jax.block_until_ready(y_odd)
    assert y_odd.shape == z_odd.shape
    assert jnp.allclose(y_odd, z_odd - jnp.float32(dt) * alpha[0], atol=1e-6), \
        "mismatch vs reference (padded)"

    print("KERNEL_OK")
</pallas_src>

<mosaic_0001>
module attributes {stable_mosaic.version = 11 : i64} {
  func.func @_lineal_kernel(%arg0: i32, %arg1: memref<1x1xf32, #tpu.memory_space<smem>>, %arg2: memref<8x512xf32, #tpu.memory_space<vmem>>, %arg3: memref<8x512xf32, #tpu.memory_space<vmem>>) attributes {dimension_semantics = [#tpu.dimension_semantics<parallel>], iteration_bounds = array<i64: 1>, scalar_prefetch = 0 : i64, scratch_operands = 0 : i64, tpu.core_type = #tpu.core_type<tc>, window_params = [{transform_indices = @transform_0, window_bounds = array<i64: 1, 1>}, {transform_indices = @transform_1, window_bounds = array<i64: 8, 512>}, {transform_indices = @transform_2, window_bounds = array<i64: 8, 512>}]} {
    %c0 = arith.constant 0 : index
    %c0_0 = arith.constant 0 : index
    %0 = vector.load %arg2[%c0, %c0_0] : memref<8x512xf32, #tpu.memory_space<vmem>>, vector<8x512xf32>
    %c0_1 = arith.constant 0 : index
    %c0_2 = arith.constant 0 : index
    %1 = memref.load %arg1[%c0_1, %c0_2] : memref<1x1xf32, #tpu.memory_space<smem>>
    %2 = vector.broadcast %1 : f32 to vector<8x512xf32>
    %3 = arith.subf %0, %2 : vector<8x512xf32>
    %c0_3 = arith.constant 0 : index
    %c0_4 = arith.constant 0 : index
    %4 = vector.load %arg3[%c0_3, %c0_4] : memref<8x512xf32, #tpu.memory_space<vmem>>, vector<8x512xf32>
    tpu.vector_store %arg3[%c0_3, %c0_4], %3 {strides = array<i32>} : memref<8x512xf32, #tpu.memory_space<vmem>>, vector<8x512xf32>,
    return
  }
  func.func @transform_0(%arg0: i32) -> (i32, i32) {
    %c0_i32 = arith.constant 0 : i32
    %c0_i32_0 = arith.constant 0 : i32
    %c0_i32_1 = arith.constant 0 : i32
    return %c0_i32, %c0_i32_0 : i32, i32
  }
  func.func @transform_1(%arg0: i32) -> (i32, i32) {
    %c0_i32 = arith.constant 0 : i32
    %c0_i32_0 = arith.constant 0 : i32
    return %arg0, %c0_i32 : i32, i32
  }
  func.func @transform_2(%arg0: i32) -> (i32, i32) {
    %c0_i32 = arith.constant 0 : i32
    %c0_i32_0 = arith.constant 0 : i32
    return %arg0, %c0_i32 : i32, i32
  }
}

</mosaic_0001>

<llo_original>
// kernel: tpu_custom_call.1
$region0: #{tpu_custom_call.1}
  #allocation0 [shape = 'u32[]', space=smem, size = 0x4, offset = 0x4, fixed_abs, tag = 'smem constant byte address 0x4 - core index']
  #allocation1 [shape = 'u32[144,128]{1,0:T(1,128)}', space=vmem, size = 0x12000, scoped, tag = 'internal scratch']
  #allocation2 [shape = 'f32[1,1]{1,0:T(1,128)S(6)}', space=smem, size = 0x200, scoped, tag = 'scoped memory for tpu_custom_call.1']
  %s0 = inlined_call_operand.<no memory space> [shape: f32[1,1], index: 0, kind: input, shape index: {}]
  %s1 = inlined_call_operand.hbm [shape: f32[8,512], index: 1, kind: input, shape index: {}]
  %s2 = inlined_call_operand.hbm [shape: f32[8,512], index: 2, kind: output, shape index: {}]
  %s3 = sld [smem:[#allocation0]]
  $region22: #{tpu_custom_call.1} parent=0
    _
  %s5 = ssub.s32 1, %s3
  %s6 = scalar_select 0, %s5, %s3
  %7 = sst [smem:[#allocation2]] %s0
  $region1: #{tpu_custom_call.1} parent=0
    #allocation3 [shape = 'u8[16384]{0}', space=vmem, size = 0x4000, scoped, tag = 'input window, operand 1, single buffered']
    #allocation4 [shape = 's32[1]{0}', space=sflag, size = 0x4, scoped, tag = 'scoped memory for tpu_custom_call.1']
    #allocation5 [shape = 's32[1]{0}', space=sflag, size = 0x4, scoped, tag = 'scoped memory for tpu_custom_call.1']
    #allocation6 [shape = 'u8[16384]{0}', space=vmem, size = 0x4000, scoped, tag = 'output window, operand 0, single buffered']
    %8 = vsyncpa [#allocation4], 0
    %9 = vsyncpa [#allocation5], 0
    // Predicated region
    $region2: #{tpu_custom_call.1} parent=1 // pred_check
      _
    $region3: #{tpu_custom_call.1} parent=1 // pred_check_branch
      %11 = sbr.rel (0) target = $region5
    $region4: #{tpu_custom_call.1} parent=1 // pred_region
      _
    $region5: #{tpu_custom_call.1} parent=1 // pred_fallthru
      _
    // Predicated region
    $region6: #{tpu_custom_call.1} parent=1 // pred_check
      _
    $region7: #{tpu_custom_call.1} parent=1 // pred_check_branch
      %13 = sbr.rel (0) target = $region9
    $region8: #{tpu_custom_call.1} parent=1 // pred_region
      %s15 = ssub.s32 512, 512
      %16 = vsyncadd [#allocation4], %s15
      %s18 = sshll.u32 [#allocation3], 4
      %s19 = int_to_ptr.vmem [resolvable:$true] %s18
      %21 = dma.hbm_to_vmem [thread:$0]  %s1, 512, %s19, [#allocation4]
    $region9: #{tpu_custom_call.1} parent=1 // pred_fallthru
      _
    // Predicated region
    $region10: #{tpu_custom_call.1} parent=1 // pred_check
      _
    $region11: #{tpu_custom_call.1} parent=1 // pred_check_branch
      %23 = sbr.rel (0) target = $region13
    $region12: #{tpu_custom_call.1} parent=1 // pred_region
      %24 = dma.done [#allocation4], 512
    $region13: #{tpu_custom_call.1} parent=1 // pred_fallthru
      _
    %v25 = vld [vmem:[#allocation3] sm:$0xff]
    %v26 = vld [vmem:[#allocation3 + $0x8] sm:$0xff]
    %v27 = vld [vmem:[#allocation3 + $0x10] sm:$0xff]
    %v28 = vld [vmem:[#allocation3 + $0x18] sm:$0xff]
    %s29 = sld [smem:[#allocation2]]
    %v30 = vstv %s29
    %v31 = vsub.f32 %v25, %v30
    %v32 = vsub.f32 %v26, %v30
    %v33 = vsub.f32 %v27, %v30
    %v34 = vsub.f32 %v28, %v30
    %35 = vst [vmem:[#allocation6] sm:$0xff] %v31
    %36 = vst [vmem:[#allocation6 + $0x8] sm:$0xff] %v32
    %37 = vst [vmem:[#allocation6 + $0x10] sm:$0xff] %v33
    %38 = vst [vmem:[#allocation6 + $0x18] sm:$0xff] %v34
    // Predicated region
    $region14: #{tpu_custom_call.1} parent=1 // pred_check
      _
    $region15: #{tpu_custom_call.1} parent=1 // pred_check_branch
      %40 = sbr.rel (0) target = $region17
    $region16: #{tpu_custom_call.1} parent=1 // pred_region
      %s42 = ssub.s32 512, 512
      %43 = vsyncadd [#allocation5], %s42
      %s45 = sshll.u32 [#allocation6], 4
      %s46 = int_to_ptr.vmem [resolvable:$true] %s45
      %48 = dma.vmem_to_hbm [thread:$0]  %s46, 512, %s2, [#allocation5]
    $region17: #{tpu_custom_call.1} parent=1 // pred_fallthru
      _
    // Predicated region
    $region18: #{tpu_custom_call.1} parent=1 // pred_check
      _
    $region19: #{tpu_custom_call.1} parent=1 // pred_check_branch
      %50 = sbr.rel (0) target = $region21
    $region20: #{tpu_custom_call.1} parent=1 // pred_region
      %51 = dma.done [#allocation5], 512
    $region21: #{tpu_custom_call.1} parent=1 // pred_fallthru
      _
    %52 = vsyncpa [#allocation4], 1
    %53 = vsyncpa [#allocation5], 1

</llo_original>
